<compile_context>
chip_gen: v7x
topology: tpu7x:2x2x1
jax: 0.10.0
libtpu: 0.0.40
codegen_flags: <defaults>
</compile_context>

<pallas_src>
import functools

import jax
import jax.numpy as jnp
import numpy as np
from jax import lax
from jax.experimental import pallas as pl
from jax.experimental.pallas import tpu as pltpu


def _focal_cosine_partials_kernel(
    x_ref, t_ref, bce_out, dot_out, sx_out, st_out, *,
    total_rows, block_b, num_row_blocks, steps_per_shard,
    group_rows, groups_per_iter, has_dangling):
  """Accumulates lane-dense partial sums for one (block_b, C) batch tile."""
  s = pl.program_id(0)          # shard (parallel axis)
  i = pl.program_id(1)          # batch-reduction step within the shard

  @pl.when(i == 0)
  def _init():
    bce_out[...] = jnp.zeros_like(bce_out)
    dot_out[...] = jnp.zeros_like(dot_out)
    sx_out[...] = jnp.zeros_like(sx_out)
    st_out[...] = jnp.zeros_like(st_out)

  block_idx = s * steps_per_shard + i

  def accum_group(row_start, rows_valid):
    # rows_valid is a static Python int in (0, group_rows].
    x = x_ref[pl.ds(row_start, group_rows), :].astype(jnp.float32)
    t = t_ref[pl.ds(row_start, group_rows), :].astype(jnp.float32)
    if rows_valid < group_rows:
      # Partial tail group: rows >= rows_valid are Pallas block padding
      # (arbitrary bits) -> zero the inputs before any math.
      mask = lax.broadcasted_iota(jnp.int32, (group_rows, 1), 0) < rows_valid
      x = jnp.where(mask, x, 0.0)
      t = jnp.where(mask, t, 0.0)
    xt = x * t                                     # reused by bce and dot
    bce = jnp.maximum(x, 0.0) - xt + jnp.log1p(jnp.exp(-jnp.abs(x)))
    if rows_valid < group_rows:
      bce = jnp.where(mask, bce, 0.0)              # zeroed rows give log(2)
    bce_out[...] += bce
    dot_out[...] += xt
    sx_out[...] += x * x
    st_out[...] += t * t

  def accumulate(rows_valid_in_block):
    # rows_valid_in_block is static.
    full_groups = rows_valid_in_block // group_rows
    rem_rows = rows_valid_in_block - full_groups * group_rows
    n_super = full_groups // groups_per_iter
    rows_per_iter = group_rows * groups_per_iter
    if n_super > 0:
      def super_body(sg, carry):
        base = pl.multiple_of(sg * rows_per_iter, rows_per_iter)
        for u in range(groups_per_iter):
          accum_group(base + u * group_rows, group_rows)
        return carry
      lax.fori_loop(0, n_super, super_body, 0)
    for g in range(n_super * groups_per_iter, full_groups):
      accum_group(g * group_rows, group_rows)
    if rem_rows:
      accum_group(full_groups * group_rows, rem_rows)

  tail_rows = total_rows - (num_row_blocks - 1) * block_b  # static, (0, block_b]

  if tail_rows == block_b and not has_dangling:
    accumulate(block_b)
  elif tail_rows == block_b:
    @pl.when(block_idx < num_row_blocks)      # skip the dangling grid step
    def _():
      accumulate(block_b)
  else:
    @pl.when(block_idx < num_row_blocks - 1)
    def _():
      accumulate(block_b)

    @pl.when(block_idx == num_row_blocks - 1)  # masked tail block
    def _():
      accumulate(tail_rows)


def _vmem_capacity_bytes():
  try:
    info = pltpu.get_tpu_info()
    return int(getattr(info, "vmem_capacity_bytes", 64 << 20))
  except Exception:
    return 64 << 20


def _pipeline_budget_bytes():
  # Budget for 2 inputs x 2 pipeline buffers: ~24 MiB on 128-MiB-VMEM chips
  # (v5e/v6e), ~16 MiB on v7x (64 MiB per TensorCore).
  return min(24 << 20, _vmem_capacity_bytes() // 4)


def _pick_block_b(B, C, bytes_per_elem_both, group_rows, *, max_rows=2048):
  row_bytes = C * bytes_per_elem_both
  cap_rows = _pipeline_budget_bytes() // (2 * row_bytes)  # /2: double-buffered
  cap_rows = int(max(group_rows, min(cap_rows, max_rows)))
  if B <= cap_rows:
    # Whole batch in one (or one + small remainder) tile; keep block <= B so
    # only the remainder-group masking path touches padded rows.
    if B >= group_rows:
      return (B // group_rows) * group_rows
    return group_rows
  rows_per_iter = group_rows * 8
  if cap_rows >= rows_per_iter:
    return (cap_rows // rows_per_iter) * rows_per_iter
  return (cap_rows // group_rows) * group_rows


def focal_cosine_loss(x, t, *, alpha=1.0, gamma=2, xent=0.1,
                      block_b=None, num_shards=None):
  """x, t: (B, C) arrays (float32 or bfloat16). Returns a scalar f32 loss."""
  B, C = x.shape
  assert t.shape == (B, C)

  # Sub-32-bit inputs pack 2x/4x rows per sublane -> taller row groups keep
  # the in-kernel group loads native-tile aligned.
  x_isz = jnp.dtype(x.dtype).itemsize
  t_isz = jnp.dtype(t.dtype).itemsize
  group_rows = 8 * max(1, 4 // int(min(x_isz, t_isz)))
  bytes_both = int(x_isz + t_isz)

  if block_b is None:
    block_b = _pick_block_b(B, C, bytes_both, group_rows)
  block_b = max(group_rows, (int(block_b) // group_rows) * group_rows)

  num_row_blocks = (B + block_b - 1) // block_b
  if num_shards is None:
    num_shards = 2 if num_row_blocks >= 2 else 1
  num_shards = max(1, min(int(num_shards), num_row_blocks))
  steps = (num_row_blocks + num_shards - 1) // num_shards
  has_dangling = (num_shards * steps != num_row_blocks)

  kernel = functools.partial(
      _focal_cosine_partials_kernel,
      total_rows=B,
      block_b=block_b,
      num_row_blocks=num_row_blocks,
      steps_per_shard=steps,
      group_rows=group_rows,
      groups_per_iter=8,
      has_dangling=has_dangling,
  )

  if has_dangling:
    # The dangling last step of the last shard re-fetches the final block; the
    # kernel skips its accumulation so nothing is double counted.
    def in_map(s, i):
      return (jnp.minimum(s * steps + i, num_row_blocks - 1), 0)
  else:
    def in_map(s, i):
      return (s * steps + i, 0)

  part = jax.ShapeDtypeStruct((num_shards, group_rows, C), jnp.float32)
  out_spec = pl.BlockSpec((None, group_rows, C), lambda s, i: (s, 0, 0))

  vmem_limit = int(_pipeline_budget_bytes() + (8 << 20))

  bce_p, dot_p, sx_p, st_p = pl.pallas_call(
      kernel,
      out_shape=(part, part, part, part),
      grid_spec=pltpu.PrefetchScalarGridSpec(
          num_scalar_prefetch=0,
          grid=(num_shards, steps),
          in_specs=[
              pl.BlockSpec((block_b, C), in_map),
              pl.BlockSpec((block_b, C), in_map),
          ],
          out_specs=(out_spec, out_spec, out_spec, out_spec),
      ),
      compiler_params=pltpu.CompilerParams(
          dimension_semantics=("parallel", "arbitrary"),
          vmem_limit_bytes=vmem_limit,
      ),
  )(x, t)

  # Tiny finalize on the (num_shards, group_rows, C) partials in plain JAX.
  # NOTE: eps handling matches the pure-JAX reference (PyTorch clamps the norm
  # product with eps instead; identical unless a class column is ~zero-norm).
  eps = 1e-12
  cent = jnp.sum(bce_p) / float(B * C)
  dot = jnp.sum(dot_p, axis=(0, 1))
  sx = jnp.sum(sx_p, axis=(0, 1)) + eps
  st = jnp.sum(st_p, axis=(0, 1)) + eps
  cosine_loss = jnp.mean(1.0 - dot / jnp.sqrt(sx * st))
  pt = jnp.exp(-cent)
  focal = alpha * (1.0 - pt) ** gamma * cent
  return cosine_loss + xent * focal


def _reference(x, t, alpha=1.0, gamma=2, xent=0.1):
  """Pure-JAX replica of the PyTorch forward for validation."""
  x = x.astype(jnp.float32)
  t = t.astype(jnp.float32)
  bce = jnp.maximum(x, 0.0) - x * t + jnp.log1p(jnp.exp(-jnp.abs(x)))
  cent = jnp.mean(bce)
  dot = jnp.sum(x * t, axis=0)
  sx = jnp.sum(x * x, axis=0) + 1e-12
  st = jnp.sum(t * t, axis=0) + 1e-12
  cosine_loss = jnp.mean(1.0 - dot / jnp.sqrt(sx * st))
  pt = jnp.exp(-cent)
  focal = alpha * (1.0 - pt) ** gamma * cent
  return cosine_loss + xent * focal


if __name__ == "__main__":
  key = jax.random.PRNGKey(0)

  def check(x, t, **kw):
    loss = jax.block_until_ready(focal_cosine_loss(x, t, **kw))
    ref = jax.block_until_ready(_reference(x, t))
    assert np.allclose(np.asarray(loss), np.asarray(ref),
                       rtol=1e-5, atol=2e-5), (float(loss), float(ref))

  # Case 1: single-tile path (one block, one shard), f32.
  k1, k2, key = jax.random.split(key, 3)
  B, C = 64, 128
  x = jax.random.normal(k1, (B, C), dtype=jnp.float32)
  t = jax.nn.one_hot(jax.random.randint(k2, (B,), 0, C), C, dtype=jnp.float32)
  check(x, t)

  # Case 2: multi-tile + two shards + masked remainder rows (196 % 64 = 4).
  k1, k2, key = jax.random.split(key, 3)
  B2, C2 = 196, 128
  x2 = jax.random.normal(k1, (B2, C2), dtype=jnp.float32)
  t2 = jax.nn.one_hot(jax.random.randint(k2, (B2,), 0, C2), C2,
                      dtype=jnp.float32)
  check(x2, t2, block_b=64)

  # Case 3: bf16 inputs (halved HBM traffic) with an odd block count, so the
  # second shard has a dangling (skipped) grid step.
  k1, k2 = jax.random.split(key)
  B3, C3 = 320, 128
  x3 = jax.random.normal(k1, (B3, C3), dtype=jnp.bfloat16)
  t3 = jax.nn.one_hot(jax.random.randint(k2, (B3,), 0, C3), C3,
                      dtype=jnp.bfloat16)
  check(x3, t3, block_b=64)

  print("KERNEL_OK")
</pallas_src>

<mosaic_0001>
module attributes {stable_mosaic.version = 11 : i64} {
  func.func @_focal_cosine_partials_kernel(%arg0: i32, %arg1: i32, %arg2: memref<64x128xf32, #tpu.memory_space<vmem>>, %arg3: memref<64x128xf32, #tpu.memory_space<vmem>>, %arg4: memref<1x8x128xf32, #tpu.memory_space<vmem>>, %arg5: memref<1x8x128xf32, #tpu.memory_space<vmem>>, %arg6: memref<1x8x128xf32, #tpu.memory_space<vmem>>, %arg7: memref<1x8x128xf32, #tpu.memory_space<vmem>>) attributes {dimension_semantics = [#tpu.dimension_semantics<parallel>, #tpu.dimension_semantics<arbitrary>], iteration_bounds = array<i64: 1, 1>, scalar_prefetch = 0 : i64, scratch_operands = 0 : i64, tpu.core_type = #tpu.core_type<tc>, window_params = [{transform_indices = @transform_0, window_bounds = array<i64: 64, 128>}, {transform_indices = @transform_1, window_bounds = array<i64: 64, 128>}, {transform_indices = @transform_2, window_bounds = array<i64: 1, 8, 128>}, {transform_indices = @transform_3, window_bounds = array<i64: 1, 8, 128>}, {transform_indices = @transform_4, window_bounds = array<i64: 1, 8, 128>}, {transform_indices = @transform_5, window_bounds = array<i64: 1, 8, 128>}]} {
    %c0_i32 = arith.constant 0 : i32
    %0 = arith.cmpi eq, %arg1, %c0_i32 : i32
    %1 = arith.extui %0 : i1 to i32
    %c0_i32_0 = arith.constant 0 : i32
    %2 = arith.cmpi ne, %1, %c0_i32_0 : i32
    scf.if %2 {
      %cst_225 = arith.constant 0.000000e+00 : f32
      %333 = vector.broadcast %cst_225 : f32 to vector<8x128xf32>
      %c0_226 = arith.constant 0 : index
      %c0_227 = arith.constant 0 : index
      %c0_228 = arith.constant 0 : index
      %334 = vector.load %arg4[%c0_226, %c0_227, %c0_228] : memref<1x8x128xf32, #tpu.memory_space<vmem>>, vector<1x8x128xf32>
      %335 = vector.shape_cast %334 : vector<1x8x128xf32> to vector<8x128xf32>
      %336 = vector.shape_cast %333 : vector<8x128xf32> to vector<1x8x128xf32>
      tpu.vector_store %arg4[%c0_226, %c0_227, %c0_228], %336 {strides = array<i32>} : memref<1x8x128xf32, #tpu.memory_space<vmem>>, vector<1x8x128xf32>,
      %cst_229 = arith.constant 0.000000e+00 : f32
      %337 = vector.broadcast %cst_229 : f32 to vector<8x128xf32>
      %c0_230 = arith.constant 0 : index
      %c0_231 = arith.constant 0 : index
      %c0_232 = arith.constant 0 : index
      %338 = vector.load %arg5[%c0_230, %c0_231, %c0_232] : memref<1x8x128xf32, #tpu.memory_space<vmem>>, vector<1x8x128xf32>
      %339 = vector.shape_cast %338 : vector<1x8x128xf32> to vector<8x128xf32>
      %340 = vector.shape_cast %337 : vector<8x128xf32> to vector<1x8x128xf32>
      tpu.vector_store %arg5[%c0_230, %c0_231, %c0_232], %340 {strides = array<i32>} : memref<1x8x128xf32, #tpu.memory_space<vmem>>, vector<1x8x128xf32>,
      %cst_233 = arith.constant 0.000000e+00 : f32
      %341 = vector.broadcast %cst_233 : f32 to vector<8x128xf32>
      %c0_234 = arith.constant 0 : index
      %c0_235 = arith.constant 0 : index
      %c0_236 = arith.constant 0 : index
      %342 = vector.load %arg6[%c0_234, %c0_235, %c0_236] : memref<1x8x128xf32, #tpu.memory_space<vmem>>, vector<1x8x128xf32>
      %343 = vector.shape_cast %342 : vector<1x8x128xf32> to vector<8x128xf32>
      %344 = vector.shape_cast %341 : vector<8x128xf32> to vector<1x8x128xf32>
      tpu.vector_store %arg6[%c0_234, %c0_235, %c0_236], %344 {strides = array<i32>} : memref<1x8x128xf32, #tpu.memory_space<vmem>>, vector<1x8x128xf32>,
      %cst_237 = arith.constant 0.000000e+00 : f32
      %345 = vector.broadcast %cst_237 : f32 to vector<8x128xf32>
      %c0_238 = arith.constant 0 : index
      %c0_239 = arith.constant 0 : index
      %c0_240 = arith.constant 0 : index
      %346 = vector.load %arg7[%c0_238, %c0_239, %c0_240] : memref<1x8x128xf32, #tpu.memory_space<vmem>>, vector<1x8x128xf32>
      %347 = vector.shape_cast %346 : vector<1x8x128xf32> to vector<8x128xf32>
      %348 = vector.shape_cast %345 : vector<8x128xf32> to vector<1x8x128xf32>
      tpu.vector_store %arg7[%c0_238, %c0_239, %c0_240], %348 {strides = array<i32>} : memref<1x8x128xf32, #tpu.memory_space<vmem>>, vector<1x8x128xf32>,
    } else {
    }
    %c0_i32_1 = arith.constant 0 : i32
    %c64_i32 = arith.constant 64 : i32
    %3 = arith.muli %c0_i32_1, %c64_i32 : i32
    %4 = tpu.assume_multiple %3, 64 : i32
    %c0_i32_2 = arith.constant 0 : i32
    %5 = arith.addi %4, %c0_i32_2 : i32
    %6 = arith.index_cast %5 : i32 to index
    %c0 = arith.constant 0 : index
    %7 = vector.load %arg2[%6, %c0] : memref<64x128xf32, #tpu.memory_space<vmem>>, vector<8x128xf32>
    %8 = arith.index_cast %5 : i32 to index
    %c0_3 = arith.constant 0 : index
    %9 = vector.load %arg3[%8, %c0_3] : memref<64x128xf32, #tpu.memory_space<vmem>>, vector<8x128xf32>
    %10 = arith.mulf %7, %9 : vector<8x128xf32>
    %cst = arith.constant 0.000000e+00 : f32
    %11 = vector.broadcast %cst : f32 to vector<8x128xf32>
    %12 = arith.maximumf %7, %11 : vector<8x128xf32>
    %13 = arith.subf %12, %10 : vector<8x128xf32>
    %14 = math.absf %7 : vector<8x128xf32>
    %cst_4 = arith.constant 0.000000e+00 : f32
    %15 = vector.broadcast %cst_4 : f32 to vector<8x128xf32>
    %16 = arith.subf %15, %14 : vector<8x128xf32>
    %17 = math.exp %16 : vector<8x128xf32>
    %18 = math.log1p %17 : vector<8x128xf32>
    %19 = arith.addf %13, %18 : vector<8x128xf32>
    %c0_5 = arith.constant 0 : index
    %c0_6 = arith.constant 0 : index
    %c0_7 = arith.constant 0 : index
    %20 = vector.load %arg4[%c0_5, %c0_6, %c0_7] : memref<1x8x128xf32, #tpu.memory_space<vmem>>, vector<1x8x128xf32>
    %21 = vector.shape_cast %20 : vector<1x8x128xf32> to vector<8x128xf32>
    %22 = arith.addf %21, %19 : vector<8x128xf32>
    %c0_8 = arith.constant 0 : index
    %c0_9 = arith.constant 0 : index
    %c0_10 = arith.constant 0 : index
    %23 = vector.load %arg4[%c0_8, %c0_9, %c0_10] : memref<1x8x128xf32, #tpu.memory_space<vmem>>, vector<1x8x128xf32>
    %24 = vector.shape_cast %23 : vector<1x8x128xf32> to vector<8x128xf32>
    %25 = vector.shape_cast %22 : vector<8x128xf32> to vector<1x8x128xf32>
    tpu.vector_store %arg4[%c0_8, %c0_9, %c0_10], %25 {strides = array<i32>} : memref<1x8x128xf32, #tpu.memory_space<vmem>>, vector<1x8x128xf32>,
    %c0_11 = arith.constant 0 : index
    %c0_12 = arith.constant 0 : index
    %c0_13 = arith.constant 0 : index
    %26 = vector.load %arg5[%c0_11, %c0_12, %c0_13] : memref<1x8x128xf32, #tpu.memory_space<vmem>>, vector<1x8x128xf32>
    %27 = vector.shape_cast %26 : vector<1x8x128xf32> to vector<8x128xf32>
    %28 = arith.addf %27, %10 : vector<8x128xf32>
    %c0_14 = arith.constant 0 : index
    %c0_15 = arith.constant 0 : index
    %c0_16 = arith.constant 0 : index
    %29 = vector.load %arg5[%c0_14, %c0_15, %c0_16] : memref<1x8x128xf32, #tpu.memory_space<vmem>>, vector<1x8x128xf32>
    %30 = vector.shape_cast %29 : vector<1x8x128xf32> to vector<8x128xf32>
    %31 = vector.shape_cast %28 : vector<8x128xf32> to vector<1x8x128xf32>
    tpu.vector_store %arg5[%c0_14, %c0_15, %c0_16], %31 {strides = array<i32>} : memref<1x8x128xf32, #tpu.memory_space<vmem>>, vector<1x8x128xf32>,
    %c0_17 = arith.constant 0 : index
    %c0_18 = arith.constant 0 : index
    %c0_19 = arith.constant 0 : index
    %32 = vector.load %arg6[%c0_17, %c0_18, %c0_19] : memref<1x8x128xf32, #tpu.memory_space<vmem>>, vector<1x8x128xf32>
    %33 = vector.shape_cast %32 : vector<1x8x128xf32> to vector<8x128xf32>
    %34 = arith.mulf %7, %7 : vector<8x128xf32>
    %35 = arith.addf %33, %34 : vector<8x128xf32>
    %c0_20 = arith.constant 0 : index
    %c0_21 = arith.constant 0 : index
    %c0_22 = arith.constant 0 : index
    %36 = vector.load %arg6[%c0_20, %c0_21, %c0_22] : memref<1x8x128xf32, #tpu.memory_space<vmem>>, vector<1x8x128xf32>
    %37 = vector.shape_cast %36 : vector<1x8x128xf32> to vector<8x128xf32>
    %38 = vector.shape_cast %35 : vector<8x128xf32> to vector<1x8x128xf32>
    tpu.vector_store %arg6[%c0_20, %c0_21, %c0_22], %38 {strides = array<i32>} : memref<1x8x128xf32, #tpu.memory_space<vmem>>, vector<1x8x128xf32>,
    %c0_23 = arith.constant 0 : index
    %c0_24 = arith.constant 0 : index
    %c0_25 = arith.constant 0 : index
    %39 = vector.load %arg7[%c0_23, %c0_24, %c0_25] : memref<1x8x128xf32, #tpu.memory_space<vmem>>, vector<1x8x128xf32>
    %40 = vector.shape_cast %39 : vector<1x8x128xf32> to vector<8x128xf32>
    %41 = arith.mulf %9, %9 : vector<8x128xf32>
    %42 = arith.addf %40, %41 : vector<8x128xf32>
    %c0_26 = arith.constant 0 : index
    %c0_27 = arith.constant 0 : index
    %c0_28 = arith.constant 0 : index
    %43 = vector.load %arg7[%c0_26, %c0_27, %c0_28] : memref<1x8x128xf32, #tpu.memory_space<vmem>>, vector<1x8x128xf32>
    %44 = vector.shape_cast %43 : vector<1x8x128xf32> to vector<8x128xf32>
    %45 = vector.shape_cast %42 : vector<8x128xf32> to vector<1x8x128xf32>
    tpu.vector_store %arg7[%c0_26, %c0_27, %c0_28], %45 {strides = array<i32>} : memref<1x8x128xf32, #tpu.memory_space<vmem>>, vector<1x8x128xf32>,
    %c8_i32 = arith.constant 8 : i32
    %46 = arith.addi %4, %c8_i32 : i32
    %47 = arith.index_cast %46 : i32 to index
    %c0_29 = arith.constant 0 : index
    %48 = vector.load %arg2[%47, %c0_29] : memref<64x128xf32, #tpu.memory_space<vmem>>, vector<8x128xf32>
    %49 = arith.index_cast %46 : i32 to index
    %c0_30 = arith.constant 0 : index
    %50 = vector.load %arg3[%49, %c0_30] : memref<64x128xf32, #tpu.memory_space<vmem>>, vector<8x128xf32>
    %51 = arith.mulf %48, %50 : vector<8x128xf32>
    %cst_31 = arith.constant 0.000000e+00 : f32
    %52 = vector.broadcast %cst_31 : f32 to vector<8x128xf32>
    %53 = arith.maximumf %48, %52 : vector<8x128xf32>
    %54 = arith.subf %53, %51 : vector<8x128xf32>
    %55 = math.absf %48 : vector<8x128xf32>
    %cst_32 = arith.constant 0.000000e+00 : f32
    %56 = vector.broadcast %cst_32 : f32 to vector<8x128xf32>
    %57 = arith.subf %56, %55 : vector<8x128xf32>
    %58 = math.exp %57 : vector<8x128xf32>
    %59 = math.log1p %58 : vector<8x128xf32>
    %60 = arith.addf %54, %59 : vector<8x128xf32>
    %c0_33 = arith.constant 0 : index
    %c0_34 = arith.constant 0 : index
    %c0_35 = arith.constant 0 : index
    %61 = vector.load %arg4[%c0_33, %c0_34, %c0_35] : memref<1x8x128xf32, #tpu.memory_space<vmem>>, vector<1x8x128xf32>
    %62 = vector.shape_cast %61 : vector<1x8x128xf32> to vector<8x128xf32>
    %63 = arith.addf %62, %60 : vector<8x128xf32>
    %c0_36 = arith.constant 0 : index
    %c0_37 = arith.constant 0 : index
    %c0_38 = arith.constant 0 : index
    %64 = vector.load %arg4[%c0_36, %c0_37, %c0_38] : memref<1x8x128xf32, #tpu.memory_space<vmem>>, vector<1x8x128xf32>
    %65 = vector.shape_cast %64 : vector<1x8x128xf32> to vector<8x128xf32>
    %66 = vector.shape_cast %63 : vector<8x128xf32> to vector<1x8x128xf32>
    tpu.vector_store %arg4[%c0_36, %c0_37, %c0_38], %66 {strides = array<i32>} : memref<1x8x128xf32, #tpu.memory_space<vmem>>, vector<1x8x128xf32>,
    %c0_39 = arith.constant 0 : index
    %c0_40 = arith.constant 0 : index
    %c0_41 = arith.constant 0 : index
    %67 = vector.load %arg5[%c0_39, %c0_40, %c0_41] : memref<1x8x128xf32, #tpu.memory_space<vmem>>, vector<1x8x128xf32>
    %68 = vector.shape_cast %67 : vector<1x8x128xf32> to vector<8x128xf32>
    %69 = arith.addf %68, %51 : vector<8x128xf32>
    %c0_42 = arith.constant 0 : index
    %c0_43 = arith.constant 0 : index
    %c0_44 = arith.constant 0 : index
    %70 = vector.load %arg5[%c0_42, %c0_43, %c0_44] : memref<1x8x128xf32, #tpu.memory_space<vmem>>, vector<1x8x128xf32>
    %71 = vector.shape_cast %70 : vector<1x8x128xf32> to vector<8x128xf32>
    %72 = vector.shape_cast %69 : vector<8x128xf32> to vector<1x8x128xf32>
    tpu.vector_store %arg5[%c0_42, %c0_43, %c0_44], %72 {strides = array<i32>} : memref<1x8x128xf32, #tpu.memory_space<vmem>>, vector<1x8x128xf32>,
    %c0_45 = arith.constant 0 : index
    %c0_46 = arith.constant 0 : index
    %c0_47 = arith.constant 0 : index
    %73 = vector.load %arg6[%c0_45, %c0_46, %c0_47] : memref<1x8x128xf32, #tpu.memory_space<vmem>>, vector<1x8x128xf32>
    %74 = vector.shape_cast %73 : vector<1x8x128xf32> to vector<8x128xf32>
    %75 = arith.mulf %48, %48 : vector<8x128xf32>
    %76 = arith.addf %74, %75 : vector<8x128xf32>
    %c0_48 = arith.constant 0 : index
    %c0_49 = arith.constant 0 : index
    %c0_50 = arith.constant 0 : index
    %77 = vector.load %arg6[%c0_48, %c0_49, %c0_50] : memref<1x8x128xf32, #tpu.memory_space<vmem>>, vector<1x8x128xf32>
    %78 = vector.shape_cast %77 : vector<1x8x128xf32> to vector<8x128xf32>
    %79 = vector.shape_cast %76 : vector<8x128xf32> to vector<1x8x128xf32>
    tpu.vector_store %arg6[%c0_48, %c0_49, %c0_50], %79 {strides = array<i32>} : memref<1x8x128xf32, #tpu.memory_space<vmem>>, vector<1x8x128xf32>,
    %c0_51 = arith.constant 0 : index
    %c0_52 = arith.constant 0 : index
    %c0_53 = arith.constant 0 : index
    %80 = vector.load %arg7[%c0_51, %c0_52, %c0_53] : memref<1x8x128xf32, #tpu.memory_space<vmem>>, vector<1x8x128xf32>
    %81 = vector.shape_cast %80 : vector<1x8x128xf32> to vector<8x128xf32>
    %82 = arith.mulf %50, %50 : vector<8x128xf32>
    %83 = arith.addf %81, %82 : vector<8x128xf32>
    %c0_54 = arith.constant 0 : index
    %c0_55 = arith.constant 0 : index
    %c0_56 = arith.constant 0 : index
    %84 = vector.load %arg7[%c0_54, %c0_55, %c0_56] : memref<1x8x128xf32, #tpu.memory_space<vmem>>, vector<1x8x128xf32>
    %85 = vector.shape_cast %84 : vector<1x8x128xf32> to vector<8x128xf32>
    %86 = vector.shape_cast %83 : vector<8x128xf32> to vector<1x8x128xf32>
    tpu.vector_store %arg7[%c0_54, %c0_55, %c0_56], %86 {strides = array<i32>} : memref<1x8x128xf32, #tpu.memory_space<vmem>>, vector<1x8x128xf32>,
    %c16_i32 = arith.constant 16 : i32
    %87 = arith.addi %4, %c16_i32 : i32
    %88 = arith.index_cast %87 : i32 to index
    %c0_57 = arith.constant 0 : index
    %89 = vector.load %arg2[%88, %c0_57] : memref<64x128xf32, #tpu.memory_space<vmem>>, vector<8x128xf32>
    %90 = arith.index_cast %87 : i32 to index
    %c0_58 = arith.constant 0 : index
    %91 = vector.load %arg3[%90, %c0_58] : memref<64x128xf32, #tpu.memory_space<vmem>>, vector<8x128xf32>
    %92 = arith.mulf %89, %91 : vector<8x128xf32>
    %cst_59 = arith.constant 0.000000e+00 : f32
    %93 = vector.broadcast %cst_59 : f32 to vector<8x128xf32>
    %94 = arith.maximumf %89, %93 : vector<8x128xf32>
    %95 = arith.subf %94, %92 : vector<8x128xf32>
    %96 = math.absf %89 : vector<8x128xf32>
    %cst_60 = arith.constant 0.000000e+00 : f32
    %97 = vector.broadcast %cst_60 : f32 to vector<8x128xf32>
    %98 = arith.subf %97, %96 : vector<8x128xf32>
    %99 = math.exp %98 : vector<8x128xf32>
    %100 = math.log1p %99 : vector<8x128xf32>
    %101 = arith.addf %95, %100 : vector<8x128xf32>
    %c0_61 = arith.constant 0 : index
    %c0_62 = arith.constant 0 : index
    %c0_63 = arith.constant 0 : index
    %102 = vector.load %arg4[%c0_61, %c0_62, %c0_63] : memref<1x8x128xf32, #tpu.memory_space<vmem>>, vector<1x8x128xf32>
    %103 = vector.shape_cast %102 : vector<1x8x128xf32> to vector<8x128xf32>
    %104 = arith.addf %103, %101 : vector<8x128xf32>
    %c0_64 = arith.constant 0 : index
    %c0_65 = arith.constant 0 : index
    %c0_66 = arith.constant 0 : index
    %105 = vector.load %arg4[%c0_64, %c0_65, %c0_66] : memref<1x8x128xf32, #tpu.memory_space<vmem>>, vector<1x8x128xf32>
    %106 = vector.shape_cast %105 : vector<1x8x128xf32> to vector<8x128xf32>
    %107 = vector.shape_cast %104 : vector<8x128xf32> to vector<1x8x128xf32>
    tpu.vector_store %arg4[%c0_64, %c0_65, %c0_66], %107 {strides = array<i32>} : memref<1x8x128xf32, #tpu.memory_space<vmem>>, vector<1x8x128xf32>,
    %c0_67 = arith.constant 0 : index
    %c0_68 = arith.constant 0 : index
    %c0_69 = arith.constant 0 : index
    %108 = vector.load %arg5[%c0_67, %c0_68, %c0_69] : memref<1x8x128xf32, #tpu.memory_space<vmem>>, vector<1x8x128xf32>
    %109 = vector.shape_cast %108 : vector<1x8x128xf32> to vector<8x128xf32>
    %110 = arith.addf %109, %92 : vector<8x128xf32>
    %c0_70 = arith.constant 0 : index
    %c0_71 = arith.constant 0 : index
    %c0_72 = arith.constant 0 : index
    %111 = vector.load %arg5[%c0_70, %c0_71, %c0_72] : memref<1x8x128xf32, #tpu.memory_space<vmem>>, vector<1x8x128xf32>
    %112 = vector.shape_cast %111 : vector<1x8x128xf32> to vector<8x128xf32>
    %113 = vector.shape_cast %110 : vector<8x128xf32> to vector<1x8x128xf32>
    tpu.vector_store %arg5[%c0_70, %c0_71, %c0_72], %113 {strides = array<i32>} : memref<1x8x128xf32, #tpu.memory_space<vmem>>, vector<1x8x128xf32>,
    %c0_73 = arith.constant 0 : index
    %c0_74 = arith.constant 0 : index
    %c0_75 = arith.constant 0 : index
    %114 = vector.load %arg6[%c0_73, %c0_74, %c0_75] : memref<1x8x128xf32, #tpu.memory_space<vmem>>, vector<1x8x128xf32>
    %115 = vector.shape_cast %114 : vector<1x8x128xf32> to vector<8x128xf32>
    %116 = arith.mulf %89, %89 : vector<8x128xf32>
    %117 = arith.addf %115, %116 : vector<8x128xf32>
    %c0_76 = arith.constant 0 : index
    %c0_77 = arith.constant 0 : index
    %c0_78 = arith.constant 0 : index
    %118 = vector.load %arg6[%c0_76, %c0_77, %c0_78] : memref<1x8x128xf32, #tpu.memory_space<vmem>>, vector<1x8x128xf32>
    %119 = vector.shape_cast %118 : vector<1x8x128xf32> to vector<8x128xf32>
    %120 = vector.shape_cast %117 : vector<8x128xf32> to vector<1x8x128xf32>
    tpu.vector_store %arg6[%c0_76, %c0_77, %c0_78], %120 {strides = array<i32>} : memref<1x8x128xf32, #tpu.memory_space<vmem>>, vector<1x8x128xf32>,
    %c0_79 = arith.constant 0 : index
    %c0_80 = arith.constant 0 : index
    %c0_81 = arith.constant 0 : index
    %121 = vector.load %arg7[%c0_79, %c0_80, %c0_81] : memref<1x8x128xf32, #tpu.memory_space<vmem>>, vector<1x8x128xf32>
    %122 = vector.shape_cast %121 : vector<1x8x128xf32> to vector<8x128xf32>
    %123 = arith.mulf %91, %91 : vector<8x128xf32>
    %124 = arith.addf %122, %123 : vector<8x128xf32>
    %c0_82 = arith.constant 0 : index
    %c0_83 = arith.constant 0 : index
    %c0_84 = arith.constant 0 : index
    %125 = vector.load %arg7[%c0_82, %c0_83, %c0_84] : memref<1x8x128xf32, #tpu.memory_space<vmem>>, vector<1x8x128xf32>
    %126 = vector.shape_cast %125 : vector<1x8x128xf32> to vector<8x128xf32>
    %127 = vector.shape_cast %124 : vector<8x128xf32> to vector<1x8x128xf32>
    tpu.vector_store %arg7[%c0_82, %c0_83, %c0_84], %127 {strides = array<i32>} : memref<1x8x128xf32, #tpu.memory_space<vmem>>, vector<1x8x128xf32>,
    %c24_i32 = arith.constant 24 : i32
    %128 = arith.addi %4, %c24_i32 : i32
    %129 = arith.index_cast %128 : i32 to index
    %c0_85 = arith.constant 0 : index
    %130 = vector.load %arg2[%129, %c0_85] : memref<64x128xf32, #tpu.memory_space<vmem>>, vector<8x128xf32>
    %131 = arith.index_cast %128 : i32 to index
    %c0_86 = arith.constant 0 : index
    %132 = vector.load %arg3[%131, %c0_86] : memref<64x128xf32, #tpu.memory_space<vmem>>, vector<8x128xf32>
    %133 = arith.mulf %130, %132 : vector<8x128xf32>
    %cst_87 = arith.constant 0.000000e+00 : f32
    %134 = vector.broadcast %cst_87 : f32 to vector<8x128xf32>
    %135 = arith.maximumf %130, %134 : vector<8x128xf32>
    %136 = arith.subf %135, %133 : vector<8x128xf32>
    %137 = math.absf %130 : vector<8x128xf32>
    %cst_88 = arith.constant 0.000000e+00 : f32
    %138 = vector.broadcast %cst_88 : f32 to vector<8x128xf32>
    %139 = arith.subf %138, %137 : vector<8x128xf32>
    %140 = math.exp %139 : vector<8x128xf32>
    %141 = math.log1p %140 : vector<8x128xf32>
    %142 = arith.addf %136, %141 : vector<8x128xf32>
    %c0_89 = arith.constant 0 : index
    %c0_90 = arith.constant 0 : index
    %c0_91 = arith.constant 0 : index
    %143 = vector.load %arg4[%c0_89, %c0_90, %c0_91] : memref<1x8x128xf32, #tpu.memory_space<vmem>>, vector<1x8x128xf32>
    %144 = vector.shape_cast %143 : vector<1x8x128xf32> to vector<8x128xf32>
    %145 = arith.addf %144, %142 : vector<8x128xf32>
    %c0_92 = arith.constant 0 : index
    %c0_93 = arith.constant 0 : index
    %c0_94 = arith.constant 0 : index
    %146 = vector.load %arg4[%c0_92, %c0_93, %c0_94] : memref<1x8x128xf32, #tpu.memory_space<vmem>>, vector<1x8x128xf32>
    %147 = vector.shape_cast %146 : vector<1x8x128xf32> to vector<8x128xf32>
    %148 = vector.shape_cast %145 : vector<8x128xf32> to vector<1x8x128xf32>
    tpu.vector_store %arg4[%c0_92, %c0_93, %c0_94], %148 {strides = array<i32>} : memref<1x8x128xf32, #tpu.memory_space<vmem>>, vector<1x8x128xf32>,
    %c0_95 = arith.constant 0 : index
    %c0_96 = arith.constant 0 : index
    %c0_97 = arith.constant 0 : index
    %149 = vector.load %arg5[%c0_95, %c0_96, %c0_97] : memref<1x8x128xf32, #tpu.memory_space<vmem>>, vector<1x8x128xf32>
    %150 = vector.shape_cast %149 : vector<1x8x128xf32> to vector<8x128xf32>
    %151 = arith.addf %150, %133 : vector<8x128xf32>
    %c0_98 = arith.constant 0 : index
    %c0_99 = arith.constant 0 : index
    %c0_100 = arith.constant 0 : index
    %152 = vector.load %arg5[%c0_98, %c0_99, %c0_100] : memref<1x8x128xf32, #tpu.memory_space<vmem>>, vector<1x8x128xf32>
    %153 = vector.shape_cast %152 : vector<1x8x128xf32> to vector<8x128xf32>
    %154 = vector.shape_cast %151 : vector<8x128xf32> to vector<1x8x128xf32>
    tpu.vector_store %arg5[%c0_98, %c0_99, %c0_100], %154 {strides = array<i32>} : memref<1x8x128xf32, #tpu.memory_space<vmem>>, vector<1x8x128xf32>,
    %c0_101 = arith.constant 0 : index
    %c0_102 = arith.constant 0 : index
    %c0_103 = arith.constant 0 : index
    %155 = vector.load %arg6[%c0_101, %c0_102, %c0_103] : memref<1x8x128xf32, #tpu.memory_space<vmem>>, vector<1x8x128xf32>
    %156 = vector.shape_cast %155 : vector<1x8x128xf32> to vector<8x128xf32>
    %157 = arith.mulf %130, %130 : vector<8x128xf32>
    %158 = arith.addf %156, %157 : vector<8x128xf32>
    %c0_104 = arith.constant 0 : index
    %c0_105 = arith.constant 0 : index
    %c0_106 = arith.constant 0 : index
    %159 = vector.load %arg6[%c0_104, %c0_105, %c0_106] : memref<1x8x128xf32, #tpu.memory_space<vmem>>, vector<1x8x128xf32>
    %160 = vector.shape_cast %159 : vector<1x8x128xf32> to vector<8x128xf32>
    %161 = vector.shape_cast %158 : vector<8x128xf32> to vector<1x8x128xf32>
    tpu.vector_store %arg6[%c0_104, %c0_105, %c0_106], %161 {strides = array<i32>} : memref<1x8x128xf32, #tpu.memory_space<vmem>>, vector<1x8x128xf32>,
    %c0_107 = arith.constant 0 : index
    %c0_108 = arith.constant 0 : index
    %c0_109 = arith.constant 0 : index
    %162 = vector.load %arg7[%c0_107, %c0_108, %c0_109] : memref<1x8x128xf32, #tpu.memory_space<vmem>>, vector<1x8x128xf32>
    %163 = vector.shape_cast %162 : vector<1x8x128xf32> to vector<8x128xf32>
    %164 = arith.mulf %132, %132 : vector<8x128xf32>
    %165 = arith.addf %163, %164 : vector<8x128xf32>
    %c0_110 = arith.constant 0 : index
    %c0_111 = arith.constant 0 : index
    %c0_112 = arith.constant 0 : index
    %166 = vector.load %arg7[%c0_110, %c0_111, %c0_112] : memref<1x8x128xf32, #tpu.memory_space<vmem>>, vector<1x8x128xf32>
    %167 = vector.shape_cast %166 : vector<1x8x128xf32> to vector<8x128xf32>
    %168 = vector.shape_cast %165 : vector<8x128xf32> to vector<1x8x128xf32>
    tpu.vector_store %arg7[%c0_110, %c0_111, %c0_112], %168 {strides = array<i32>} : memref<1x8x128xf32, #tpu.memory_space<vmem>>, vector<1x8x128xf32>,
    %c32_i32 = arith.constant 32 : i32
    %169 = arith.addi %4, %c32_i32 : i32
    %170 = arith.index_cast %169 : i32 to index
    %c0_113 = arith.constant 0 : index
    %171 = vector.load %arg2[%170, %c0_113] : memref<64x128xf32, #tpu.memory_space<vmem>>, vector<8x128xf32>
    %172 = arith.index_cast %169 : i32 to index
    %c0_114 = arith.constant 0 : index
    %173 = vector.load %arg3[%172, %c0_114] : memref<64x128xf32, #tpu.memory_space<vmem>>, vector<8x128xf32>
    %174 = arith.mulf %171, %173 : vector<8x128xf32>
    %cst_115 = arith.constant 0.000000e+00 : f32
    %175 = vector.broadcast %cst_115 : f32 to vector<8x128xf32>
    %176 = arith.maximumf %171, %175 : vector<8x128xf32>
    %177 = arith.subf %176, %174 : vector<8x128xf32>
    %178 = math.absf %171 : vector<8x128xf32>
    %cst_116 = arith.constant 0.000000e+00 : f32
    %179 = vector.broadcast %cst_116 : f32 to vector<8x128xf32>
    %180 = arith.subf %179, %178 : vector<8x128xf32>
    %181 = math.exp %180 : vector<8x128xf32>
    %182 = math.log1p %181 : vector<8x128xf32>
    %183 = arith.addf %177, %182 : vector<8x128xf32>
    %c0_117 = arith.constant 0 : index
    %c0_118 = arith.constant 0 : index
    %c0_119 = arith.constant 0 : index
    %184 = vector.load %arg4[%c0_117, %c0_118, %c0_119] : memref<1x8x128xf32, #tpu.memory_space<vmem>>, vector<1x8x128xf32>
    %185 = vector.shape_cast %184 : vector<1x8x128xf32> to vector<8x128xf32>
    %186 = arith.addf %185, %183 : vector<8x128xf32>
    %c0_120 = arith.constant 0 : index
    %c0_121 = arith.constant 0 : index
    %c0_122 = arith.constant 0 : index
    %187 = vector.load %arg4[%c0_120, %c0_121, %c0_122] : memref<1x8x128xf32, #tpu.memory_space<vmem>>, vector<1x8x128xf32>
    %188 = vector.shape_cast %187 : vector<1x8x128xf32> to vector<8x128xf32>
    %189 = vector.shape_cast %186 : vector<8x128xf32> to vector<1x8x128xf32>
    tpu.vector_store %arg4[%c0_120, %c0_121, %c0_122], %189 {strides = array<i32>} : memref<1x8x128xf32, #tpu.memory_space<vmem>>, vector<1x8x128xf32>,
    %c0_123 = arith.constant 0 : index
    %c0_124 = arith.constant 0 : index
    %c0_125 = arith.constant 0 : index
    %190 = vector.load %arg5[%c0_123, %c0_124, %c0_125] : memref<1x8x128xf32, #tpu.memory_space<vmem>>, vector<1x8x128xf32>
    %191 = vector.shape_cast %190 : vector<1x8x128xf32> to vector<8x128xf32>
    %192 = arith.addf %191, %174 : vector<8x128xf32>
    %c0_126 = arith.constant 0 : index
    %c0_127 = arith.constant 0 : index
    %c0_128 = arith.constant 0 : index
    %193 = vector.load %arg5[%c0_126, %c0_127, %c0_128] : memref<1x8x128xf32, #tpu.memory_space<vmem>>, vector<1x8x128xf32>
    %194 = vector.shape_cast %193 : vector<1x8x128xf32> to vector<8x128xf32>
    %195 = vector.shape_cast %192 : vector<8x128xf32> to vector<1x8x128xf32>
    tpu.vector_store %arg5[%c0_126, %c0_127, %c0_128], %195 {strides = array<i32>} : memref<1x8x128xf32, #tpu.memory_space<vmem>>, vector<1x8x128xf32>,
    %c0_129 = arith.constant 0 : index
    %c0_130 = arith.constant 0 : index
    %c0_131 = arith.constant 0 : index
    %196 = vector.load %arg6[%c0_129, %c0_130, %c0_131] : memref<1x8x128xf32, #tpu.memory_space<vmem>>, vector<1x8x128xf32>
    %197 = vector.shape_cast %196 : vector<1x8x128xf32> to vector<8x128xf32>
    %198 = arith.mulf %171, %171 : vector<8x128xf32>
    %199 = arith.addf %197, %198 : vector<8x128xf32>
    %c0_132 = arith.constant 0 : index
    %c0_133 = arith.constant 0 : index
    %c0_134 = arith.constant 0 : index
    %200 = vector.load %arg6[%c0_132, %c0_133, %c0_134] : memref<1x8x128xf32, #tpu.memory_space<vmem>>, vector<1x8x128xf32>
    %201 = vector.shape_cast %200 : vector<1x8x128xf32> to vector<8x128xf32>
    %202 = vector.shape_cast %199 : vector<8x128xf32> to vector<1x8x128xf32>
    tpu.vector_store %arg6[%c0_132, %c0_133, %c0_134], %202 {strides = array<i32>} : memref<1x8x128xf32, #tpu.memory_space<vmem>>, vector<1x8x128xf32>,
    %c0_135 = arith.constant 0 : index
    %c0_136 = arith.constant 0 : index
    %c0_137 = arith.constant 0 : index
    %203 = vector.load %arg7[%c0_135, %c0_136, %c0_137] : memref<1x8x128xf32, #tpu.memory_space<vmem>>, vector<1x8x128xf32>
    %204 = vector.shape_cast %203 : vector<1x8x128xf32> to vector<8x128xf32>
    %205 = arith.mulf %173, %173 : vector<8x128xf32>
    %206 = arith.addf %204, %205 : vector<8x128xf32>
    %c0_138 = arith.constant 0 : index
    %c0_139 = arith.constant 0 : index
    %c0_140 = arith.constant 0 : index
    %207 = vector.load %arg7[%c0_138, %c0_139, %c0_140] : memref<1x8x128xf32, #tpu.memory_space<vmem>>, vector<1x8x128xf32>
    %208 = vector.shape_cast %207 : vector<1x8x128xf32> to vector<8x128xf32>
    %209 = vector.shape_cast %206 : vector<8x128xf32> to vector<1x8x128xf32>
    tpu.vector_store %arg7[%c0_138, %c0_139, %c0_140], %209 {strides = array<i32>} : memref<1x8x128xf32, #tpu.memory_space<vmem>>, vector<1x8x128xf32>,
    %c40_i32 = arith.constant 40 : i32
    %210 = arith.addi %4, %c40_i32 : i32
    %211 = arith.index_cast %210 : i32 to index
    %c0_141 = arith.constant 0 : index
    %212 = vector.load %arg2[%211, %c0_141] : memref<64x128xf32, #tpu.memory_space<vmem>>, vector<8x128xf32>
    %213 = arith.index_cast %210 : i32 to index
    %c0_142 = arith.constant 0 : index
    %214 = vector.load %arg3[%213, %c0_142] : memref<64x128xf32, #tpu.memory_space<vmem>>, vector<8x128xf32>
    %215 = arith.mulf %212, %214 : vector<8x128xf32>
    %cst_143 = arith.constant 0.000000e+00 : f32
    %216 = vector.broadcast %cst_143 : f32 to vector<8x128xf32>
    %217 = arith.maximumf %212, %216 : vector<8x128xf32>
    %218 = arith.subf %217, %215 : vector<8x128xf32>
    %219 = math.absf %212 : vector<8x128xf32>
    %cst_144 = arith.constant 0.000000e+00 : f32
    %220 = vector.broadcast %cst_144 : f32 to vector<8x128xf32>
    %221 = arith.subf %220, %219 : vector<8x128xf32>
    %222 = math.exp %221 : vector<8x128xf32>
    %223 = math.log1p %222 : vector<8x128xf32>
    %224 = arith.addf %218, %223 : vector<8x128xf32>
    %c0_145 = arith.constant 0 : index
    %c0_146 = arith.constant 0 : index
    %c0_147 = arith.constant 0 : index
    %225 = vector.load %arg4[%c0_145, %c0_146, %c0_147] : memref<1x8x128xf32, #tpu.memory_space<vmem>>, vector<1x8x128xf32>
    %226 = vector.shape_cast %225 : vector<1x8x128xf32> to vector<8x128xf32>
    %227 = arith.addf %226, %224 : vector<8x128xf32>
    %c0_148 = arith.constant 0 : index
    %c0_149 = arith.constant 0 : index
    %c0_150 = arith.constant 0 : index
    %228 = vector.load %arg4[%c0_148, %c0_149, %c0_150] : memref<1x8x128xf32, #tpu.memory_space<vmem>>, vector<1x8x128xf32>
    %229 = vector.shape_cast %228 : vector<1x8x128xf32> to vector<8x128xf32>
    %230 = vector.shape_cast %227 : vector<8x128xf32> to vector<1x8x128xf32>
    tpu.vector_store %arg4[%c0_148, %c0_149, %c0_150], %230 {strides = array<i32>} : memref<1x8x128xf32, #tpu.memory_space<vmem>>, vector<1x8x128xf32>,
    %c0_151 = arith.constant 0 : index
    %c0_152 = arith.constant 0 : index
    %c0_153 = arith.constant 0 : index
    %231 = vector.load %arg5[%c0_151, %c0_152, %c0_153] : memref<1x8x128xf32, #tpu.memory_space<vmem>>, vector<1x8x128xf32>
    %232 = vector.shape_cast %231 : vector<1x8x128xf32> to vector<8x128xf32>
    %233 = arith.addf %232, %215 : vector<8x128xf32>
    %c0_154 = arith.constant 0 : index
    %c0_155 = arith.constant 0 : index
    %c0_156 = arith.constant 0 : index
    %234 = vector.load %arg5[%c0_154, %c0_155, %c0_156] : memref<1x8x128xf32, #tpu.memory_space<vmem>>, vector<1x8x128xf32>
    %235 = vector.shape_cast %234 : vector<1x8x128xf32> to vector<8x128xf32>
    %236 = vector.shape_cast %233 : vector<8x128xf32> to vector<1x8x128xf32>
    tpu.vector_store %arg5[%c0_154, %c0_155, %c0_156], %236 {strides = array<i32>} : memref<1x8x128xf32, #tpu.memory_space<vmem>>, vector<1x8x128xf32>,
    %c0_157 = arith.constant 0 : index
    %c0_158 = arith.constant 0 : index
    %c0_159 = arith.constant 0 : index
    %237 = vector.load %arg6[%c0_157, %c0_158, %c0_159] : memref<1x8x128xf32, #tpu.memory_space<vmem>>, vector<1x8x128xf32>
    %238 = vector.shape_cast %237 : vector<1x8x128xf32> to vector<8x128xf32>
    %239 = arith.mulf %212, %212 : vector<8x128xf32>
    %240 = arith.addf %238, %239 : vector<8x128xf32>
    %c0_160 = arith.constant 0 : index
    %c0_161 = arith.constant 0 : index
    %c0_162 = arith.constant 0 : index
    %241 = vector.load %arg6[%c0_160, %c0_161, %c0_162] : memref<1x8x128xf32, #tpu.memory_space<vmem>>, vector<1x8x128xf32>
    %242 = vector.shape_cast %241 : vector<1x8x128xf32> to vector<8x128xf32>
    %243 = vector.shape_cast %240 : vector<8x128xf32> to vector<1x8x128xf32>
    tpu.vector_store %arg6[%c0_160, %c0_161, %c0_162], %243 {strides = array<i32>} : memref<1x8x128xf32, #tpu.memory_space<vmem>>, vector<1x8x128xf32>,
    %c0_163 = arith.constant 0 : index
    %c0_164 = arith.constant 0 : index
    %c0_165 = arith.constant 0 : index
    %244 = vector.load %arg7[%c0_163, %c0_164, %c0_165] : memref<1x8x128xf32, #tpu.memory_space<vmem>>, vector<1x8x128xf32>
    %245 = vector.shape_cast %244 : vector<1x8x128xf32> to vector<8x128xf32>
    %246 = arith.mulf %214, %214 : vector<8x128xf32>
    %247 = arith.addf %245, %246 : vector<8x128xf32>
    %c0_166 = arith.constant 0 : index
    %c0_167 = arith.constant 0 : index
    %c0_168 = arith.constant 0 : index
    %248 = vector.load %arg7[%c0_166, %c0_167, %c0_168] : memref<1x8x128xf32, #tpu.memory_space<vmem>>, vector<1x8x128xf32>
    %249 = vector.shape_cast %248 : vector<1x8x128xf32> to vector<8x128xf32>
    %250 = vector.shape_cast %247 : vector<8x128xf32> to vector<1x8x128xf32>
    tpu.vector_store %arg7[%c0_166, %c0_167, %c0_168], %250 {strides = array<i32>} : memref<1x8x128xf32, #tpu.memory_space<vmem>>, vector<1x8x128xf32>,
    %c48_i32 = arith.constant 48 : i32
    %251 = arith.addi %4, %c48_i32 : i32
    %252 = arith.index_cast %251 : i32 to index
    %c0_169 = arith.constant 0 : index
    %253 = vector.load %arg2[%252, %c0_169] : memref<64x128xf32, #tpu.memory_space<vmem>>, vector<8x128xf32>
    %254 = arith.index_cast %251 : i32 to index
    %c0_170 = arith.constant 0 : index
    %255 = vector.load %arg3[%254, %c0_170] : memref<64x128xf32, #tpu.memory_space<vmem>>, vector<8x128xf32>
    %256 = arith.mulf %253, %255 : vector<8x128xf32>
    %cst_171 = arith.constant 0.000000e+00 : f32
    %257 = vector.broadcast %cst_171 : f32 to vector<8x128xf32>
    %258 = arith.maximumf %253, %257 : vector<8x128xf32>
    %259 = arith.subf %258, %256 : vector<8x128xf32>
    %260 = math.absf %253 : vector<8x128xf32>
    %cst_172 = arith.constant 0.000000e+00 : f32
    %261 = vector.broadcast %cst_172 : f32 to vector<8x128xf32>
    %262 = arith.subf %261, %260 : vector<8x128xf32>
    %263 = math.exp %262 : vector<8x128xf32>
    %264 = math.log1p %263 : vector<8x128xf32>
    %265 = arith.addf %259, %264 : vector<8x128xf32>
    %c0_173 = arith.constant 0 : index
    %c0_174 = arith.constant 0 : index
    %c0_175 = arith.constant 0 : index
    %266 = vector.load %arg4[%c0_173, %c0_174, %c0_175] : memref<1x8x128xf32, #tpu.memory_space<vmem>>, vector<1x8x128xf32>
    %267 = vector.shape_cast %266 : vector<1x8x128xf32> to vector<8x128xf32>
    %268 = arith.addf %267, %265 : vector<8x128xf32>
    %c0_176 = arith.constant 0 : index
    %c0_177 = arith.constant 0 : index
    %c0_178 = arith.constant 0 : index
    %269 = vector.load %arg4[%c0_176, %c0_177, %c0_178] : memref<1x8x128xf32, #tpu.memory_space<vmem>>, vector<1x8x128xf32>
    %270 = vector.shape_cast %269 : vector<1x8x128xf32> to vector<8x128xf32>
    %271 = vector.shape_cast %268 : vector<8x128xf32> to vector<1x8x128xf32>
    tpu.vector_store %arg4[%c0_176, %c0_177, %c0_178], %271 {strides = array<i32>} : memref<1x8x128xf32, #tpu.memory_space<vmem>>, vector<1x8x128xf32>,
    %c0_179 = arith.constant 0 : index
    %c0_180 = arith.constant 0 : index
    %c0_181 = arith.constant 0 : index
    %272 = vector.load %arg5[%c0_179, %c0_180, %c0_181] : memref<1x8x128xf32, #tpu.memory_space<vmem>>, vector<1x8x128xf32>
    %273 = vector.shape_cast %272 : vector<1x8x128xf32> to vector<8x128xf32>
    %274 = arith.addf %273, %256 : vector<8x128xf32>
    %c0_182 = arith.constant 0 : index
    %c0_183 = arith.constant 0 : index
    %c0_184 = arith.constant 0 : index
    %275 = vector.load %arg5[%c0_182, %c0_183, %c0_184] : memref<1x8x128xf32, #tpu.memory_space<vmem>>, vector<1x8x128xf32>
    %276 = vector.shape_cast %275 : vector<1x8x128xf32> to vector<8x128xf32>
    %277 = vector.shape_cast %274 : vector<8x128xf32> to vector<1x8x128xf32>
    tpu.vector_store %arg5[%c0_182, %c0_183, %c0_184], %277 {strides = array<i32>} : memref<1x8x128xf32, #tpu.memory_space<vmem>>, vector<1x8x128xf32>,
    %c0_185 = arith.constant 0 : index
    %c0_186 = arith.constant 0 : index
    %c0_187 = arith.constant 0 : index
    %278 = vector.load %arg6[%c0_185, %c0_186, %c0_187] : memref<1x8x128xf32, #tpu.memory_space<vmem>>, vector<1x8x128xf32>
    %279 = vector.shape_cast %278 : vector<1x8x128xf32> to vector<8x128xf32>
    %280 = arith.mulf %253, %253 : vector<8x128xf32>
    %281 = arith.addf %279, %280 : vector<8x128xf32>
    %c0_188 = arith.constant 0 : index
    %c0_189 = arith.constant 0 : index
    %c0_190 = arith.constant 0 : index
    %282 = vector.load %arg6[%c0_188, %c0_189, %c0_190] : memref<1x8x128xf32, #tpu.memory_space<vmem>>, vector<1x8x128xf32>
    %283 = vector.shape_cast %282 : vector<1x8x128xf32> to vector<8x128xf32>
    %284 = vector.shape_cast %281 : vector<8x128xf32> to vector<1x8x128xf32>
    tpu.vector_store %arg6[%c0_188, %c0_189, %c0_190], %284 {strides = array<i32>} : memref<1x8x128xf32, #tpu.memory_space<vmem>>, vector<1x8x128xf32>,
    %c0_191 = arith.constant 0 : index
    %c0_192 = arith.constant 0 : index
    %c0_193 = arith.constant 0 : index
    %285 = vector.load %arg7[%c0_191, %c0_192, %c0_193] : memref<1x8x128xf32, #tpu.memory_space<vmem>>, vector<1x8x128xf32>
    %286 = vector.shape_cast %285 : vector<1x8x128xf32> to vector<8x128xf32>
    %287 = arith.mulf %255, %255 : vector<8x128xf32>
    %288 = arith.addf %286, %287 : vector<8x128xf32>
    %c0_194 = arith.constant 0 : index
    %c0_195 = arith.constant 0 : index
    %c0_196 = arith.constant 0 : index
    %289 = vector.load %arg7[%c0_194, %c0_195, %c0_196] : memref<1x8x128xf32, #tpu.memory_space<vmem>>, vector<1x8x128xf32>
    %290 = vector.shape_cast %289 : vector<1x8x128xf32> to vector<8x128xf32>
    %291 = vector.shape_cast %288 : vector<8x128xf32> to vector<1x8x128xf32>
    tpu.vector_store %arg7[%c0_194, %c0_195, %c0_196], %291 {strides = array<i32>} : memref<1x8x128xf32, #tpu.memory_space<vmem>>, vector<1x8x128xf32>,
    %c56_i32 = arith.constant 56 : i32
    %292 = arith.addi %4, %c56_i32 : i32
    %293 = arith.index_cast %292 : i32 to index
    %c0_197 = arith.constant 0 : index
    %294 = vector.load %arg2[%293, %c0_197] : memref<64x128xf32, #tpu.memory_space<vmem>>, vector<8x128xf32>
    %295 = arith.index_cast %292 : i32 to index
    %c0_198 = arith.constant 0 : index
    %296 = vector.load %arg3[%295, %c0_198] : memref<64x128xf32, #tpu.memory_space<vmem>>, vector<8x128xf32>
    %297 = arith.mulf %294, %296 : vector<8x128xf32>
    %cst_199 = arith.constant 0.000000e+00 : f32
    %298 = vector.broadcast %cst_199 : f32 to vector<8x128xf32>
    %299 = arith.maximumf %294, %298 : vector<8x128xf32>
    %300 = arith.subf %299, %297 : vector<8x128xf32>
    %301 = math.absf %294 : vector<8x128xf32>
    %cst_200 = arith.constant 0.000000e+00 : f32
    %302 = vector.broadcast %cst_200 : f32 to vector<8x128xf32>
    %303 = arith.subf %302, %301 : vector<8x128xf32>
    %304 = math.exp %303 : vector<8x128xf32>
    %305 = math.log1p %304 : vector<8x128xf32>
    %306 = arith.addf %300, %305 : vector<8x128xf32>
    %c0_201 = arith.constant 0 : index
    %c0_202 = arith.constant 0 : index
    %c0_203 = arith.constant 0 : index
    %307 = vector.load %arg4[%c0_201, %c0_202, %c0_203] : memref<1x8x128xf32, #tpu.memory_space<vmem>>, vector<1x8x128xf32>
    %308 = vector.shape_cast %307 : vector<1x8x128xf32> to vector<8x128xf32>
    %309 = arith.addf %308, %306 : vector<8x128xf32>
    %c0_204 = arith.constant 0 : index
    %c0_205 = arith.constant 0 : index
    %c0_206 = arith.constant 0 : index
    %310 = vector.load %arg4[%c0_204, %c0_205, %c0_206] : memref<1x8x128xf32, #tpu.memory_space<vmem>>, vector<1x8x128xf32>
    %311 = vector.shape_cast %310 : vector<1x8x128xf32> to vector<8x128xf32>
    %312 = vector.shape_cast %309 : vector<8x128xf32> to vector<1x8x128xf32>
    tpu.vector_store %arg4[%c0_204, %c0_205, %c0_206], %312 {strides = array<i32>} : memref<1x8x128xf32, #tpu.memory_space<vmem>>, vector<1x8x128xf32>,
    %c0_207 = arith.constant 0 : index
    %c0_208 = arith.constant 0 : index
    %c0_209 = arith.constant 0 : index
    %313 = vector.load %arg5[%c0_207, %c0_208, %c0_209] : memref<1x8x128xf32, #tpu.memory_space<vmem>>, vector<1x8x128xf32>
    %314 = vector.shape_cast %313 : vector<1x8x128xf32> to vector<8x128xf32>
    %315 = arith.addf %314, %297 : vector<8x128xf32>
    %c0_210 = arith.constant 0 : index
    %c0_211 = arith.constant 0 : index
    %c0_212 = arith.constant 0 : index
    %316 = vector.load %arg5[%c0_210, %c0_211, %c0_212] : memref<1x8x128xf32, #tpu.memory_space<vmem>>, vector<1x8x128xf32>
    %317 = vector.shape_cast %316 : vector<1x8x128xf32> to vector<8x128xf32>
    %318 = vector.shape_cast %315 : vector<8x128xf32> to vector<1x8x128xf32>
    tpu.vector_store %arg5[%c0_210, %c0_211, %c0_212], %318 {strides = array<i32>} : memref<1x8x128xf32, #tpu.memory_space<vmem>>, vector<1x8x128xf32>,
    %c0_213 = arith.constant 0 : index
    %c0_214 = arith.constant 0 : index
    %c0_215 = arith.constant 0 : index
    %319 = vector.load %arg6[%c0_213, %c0_214, %c0_215] : memref<1x8x128xf32, #tpu.memory_space<vmem>>, vector<1x8x128xf32>
    %320 = vector.shape_cast %319 : vector<1x8x128xf32> to vector<8x128xf32>
    %321 = arith.mulf %294, %294 : vector<8x128xf32>
    %322 = arith.addf %320, %321 : vector<8x128xf32>
    %c0_216 = arith.constant 0 : index
    %c0_217 = arith.constant 0 : index
    %c0_218 = arith.constant 0 : index
    %323 = vector.load %arg6[%c0_216, %c0_217, %c0_218] : memref<1x8x128xf32, #tpu.memory_space<vmem>>, vector<1x8x128xf32>
    %324 = vector.shape_cast %323 : vector<1x8x128xf32> to vector<8x128xf32>
    %325 = vector.shape_cast %322 : vector<8x128xf32> to vector<1x8x128xf32>
    tpu.vector_store %arg6[%c0_216, %c0_217, %c0_218], %325 {strides = array<i32>} : memref<1x8x128xf32, #tpu.memory_space<vmem>>, vector<1x8x128xf32>,
    %c0_219 = arith.constant 0 : index
    %c0_220 = arith.constant 0 : index
    %c0_221 = arith.constant 0 : index
    %326 = vector.load %arg7[%c0_219, %c0_220, %c0_221] : memref<1x8x128xf32, #tpu.memory_space<vmem>>, vector<1x8x128xf32>
    %327 = vector.shape_cast %326 : vector<1x8x128xf32> to vector<8x128xf32>
    %328 = arith.mulf %296, %296 : vector<8x128xf32>
    %329 = arith.addf %327, %328 : vector<8x128xf32>
    %c0_222 = arith.constant 0 : index
    %c0_223 = arith.constant 0 : index
    %c0_224 = arith.constant 0 : index
    %330 = vector.load %arg7[%c0_222, %c0_223, %c0_224] : memref<1x8x128xf32, #tpu.memory_space<vmem>>, vector<1x8x128xf32>
    %331 = vector.shape_cast %330 : vector<1x8x128xf32> to vector<8x128xf32>
    %332 = vector.shape_cast %329 : vector<8x128xf32> to vector<1x8x128xf32>
    tpu.vector_store %arg7[%c0_222, %c0_223, %c0_224], %332 {strides = array<i32>} : memref<1x8x128xf32, #tpu.memory_space<vmem>>, vector<1x8x128xf32>,
    %c1_i32 = arith.constant 1 : i32
    return
  }
  func.func @transform_0(%arg0: i32, %arg1: i32) -> (i32, i32) {
    %c1_i32 = arith.constant 1 : i32
    %0 = arith.muli %arg0, %c1_i32 : i32
    %1 = arith.addi %0, %arg1 : i32
    %c0_i32 = arith.constant 0 : i32
    %c0_i32_0 = arith.constant 0 : i32
    return %1, %c0_i32 : i32, i32
  }
  func.func @transform_1(%arg0: i32, %arg1: i32) -> (i32, i32) {
    %c1_i32 = arith.constant 1 : i32
    %0 = arith.muli %arg0, %c1_i32 : i32
    %1 = arith.addi %0, %arg1 : i32
    %c0_i32 = arith.constant 0 : i32
    %c0_i32_0 = arith.constant 0 : i32
    return %1, %c0_i32 : i32, i32
  }
  func.func @transform_2(%arg0: i32, %arg1: i32) -> (i32, i32, i32) {
    %c0_i32 = arith.constant 0 : i32
    %c0_i32_0 = arith.constant 0 : i32
    %c0_i32_1 = arith.constant 0 : i32
    return %arg0, %c0_i32, %c0_i32_0 : i32, i32, i32
  }
  func.func @transform_3(%arg0: i32, %arg1: i32) -> (i32, i32, i32) {
    %c0_i32 = arith.constant 0 : i32
    %c0_i32_0 = arith.constant 0 : i32
    %c0_i32_1 = arith.constant 0 : i32
    return %arg0, %c0_i32, %c0_i32_0 : i32, i32, i32
  }
  func.func @transform_4(%arg0: i32, %arg1: i32) -> (i32, i32, i32) {
    %c0_i32 = arith.constant 0 : i32
    %c0_i32_0 = arith.constant 0 : i32
    %c0_i32_1 = arith.constant 0 : i32
    return %arg0, %c0_i32, %c0_i32_0 : i32, i32, i32
  }
  func.func @transform_5(%arg0: i32, %arg1: i32) -> (i32, i32, i32) {
    %c0_i32 = arith.constant 0 : i32
    %c0_i32_0 = arith.constant 0 : i32
    %c0_i32_1 = arith.constant 0 : i32
    return %arg0, %c0_i32, %c0_i32_0 : i32, i32, i32
  }
}

</mosaic_0001>

<llo_original>
// kernel: tpu_custom_call.1
$region0: #{tpu_custom_call.1}
  #allocation0 [shape = 'u32[]', space=smem, size = 0x4, offset = 0x4, fixed_abs, tag = 'smem constant byte address 0x4 - core index']
  #allocation1 [shape = 'u32[144,128]{1,0:T(1,128)}', space=vmem, size = 0x12000, scoped, tag = 'internal scratch']
  %s0 = inlined_call_operand.hbm [shape: f32[64,128], index: 0, kind: input, shape index: {}]
  %s1 = inlined_call_operand.hbm [shape: f32[64,128], index: 1, kind: input, shape index: {}]
  %s2 = inlined_call_operand.hbm [shape: f32[1,8,128], index: 2, kind: output, shape index: {0}]
  %s3 = inlined_call_operand.hbm [shape: f32[1,8,128], index: 3, kind: output, shape index: {1}]
  %s4 = inlined_call_operand.hbm [shape: f32[1,8,128], index: 4, kind: output, shape index: {2}]
  %s5 = inlined_call_operand.hbm [shape: f32[1,8,128], index: 5, kind: output, shape index: {3}]
  %6 = xla_tuple %s2, %s3, %s4, %s5
  %s7 = sld [smem:[#allocation0]]
  $region54: #{tpu_custom_call.1} parent=0
    _
  %s9 = ssub.s32 1, %s7
  %s10 = scalar_select 0, %s9, %s7
  $region1: #{tpu_custom_call.1} parent=0
    #allocation2 [shape = 'u8[32768]{0}', space=vmem, size = 0x8000, scoped, tag = 'input window, operand 0, single buffered']
    #allocation3 [shape = 's32[1]{0}', space=sflag, size = 0x4, scoped, tag = 'scoped memory for tpu_custom_call.1']
    #allocation4 [shape = 's32[1]{0}', space=sflag, size = 0x4, scoped, tag = 'scoped memory for tpu_custom_call.1']
    #allocation5 [shape = 'u8[32768]{0}', space=vmem, size = 0x8000, scoped, tag = 'input window, operand 1, single buffered']
    #allocation6 [shape = 's32[1]{0}', space=sflag, size = 0x4, scoped, tag = 'scoped memory for tpu_custom_call.1']
    #allocation7 [shape = 'u8[4096]{0}', space=vmem, size = 0x1000, scoped, tag = 'output window, operand 0, single buffered']
    #allocation8 [shape = 'u8[4096]{0}', space=vmem, size = 0x1000, scoped, tag = 'output window, operand 1, single buffered']
    #allocation9 [shape = 's32[1]{0}', space=sflag, size = 0x4, scoped, tag = 'scoped memory for tpu_custom_call.1']
    #allocation10 [shape = 'u8[4096]{0}', space=vmem, size = 0x1000, scoped, tag = 'output window, operand 2, single buffered']
    #allocation11 [shape = 'u8[4096]{0}', space=vmem, size = 0x1000, scoped, tag = 'output window, operand 3, single buffered']
    #allocation12 [shape = 's32[1]{0}', space=sflag, size = 0x4, scoped, tag = 'scoped memory for tpu_custom_call.1']
    %11 = vsyncpa [#allocation3], 0
    %12 = vsyncpa [#allocation6], 0
    %13 = vsyncpa [#allocation4], 0
    %14 = vsyncpa [#allocation9], 0
    %15 = vsyncpa [#allocation12], 0
    // Predicated region
    $region2: #{tpu_custom_call.1} parent=1 // pred_check
      _
    $region3: #{tpu_custom_call.1} parent=1 // pred_check_branch
      %17 = sbr.rel (0) target = $region5
    $region4: #{tpu_custom_call.1} parent=1 // pred_region
      %s18 = sadd.s32 0, 0
      %s19 = smul.u32 8, %s18
      %s21 = ssub.s32 1024, 1024
      %22 = vsyncadd [#allocation3], %s21
      %s23 = smul.addr %s19, 128
      %s24 = scalar_lea.hbm %s0, %s23
      %s25 = sshll.u32 [#allocation2], 4
      %s26 = int_to_ptr.vmem [resolvable:$true] %s25
      %31 = dma.hbm_to_vmem [thread:$0]  %s24, 1024, %s26, [#allocation3], 128, 128, 8
    $region5: #{tpu_custom_call.1} parent=1 // pred_fallthru
      _
    // Predicated region
    $region6: #{tpu_custom_call.1} parent=1 // pred_check
      _
    $region7: #{tpu_custom_call.1} parent=1 // pred_check_branch
      %33 = sbr.rel (0) target = $region9
    $region8: #{tpu_custom_call.1} parent=1 // pred_region
      %s34 = sadd.s32 0, 0
      %s35 = smul.u32 8, %s34
      %s37 = ssub.s32 1024, 1024
      %38 = vsyncadd [#allocation6], %s37
      %s39 = smul.addr %s35, 128
      %s40 = scalar_lea.hbm %s1, %s39
      %s41 = sshll.u32 [#allocation5], 4
      %s42 = int_to_ptr.vmem [resolvable:$true] %s41
      %47 = dma.hbm_to_vmem [thread:$0]  %s40, 1024, %s42, [#allocation6], 128, 128, 8
    $region9: #{tpu_custom_call.1} parent=1 // pred_fallthru
      _
    // Predicated region
    $region10: #{tpu_custom_call.1} parent=1 // pred_check
      _
    $region11: #{tpu_custom_call.1} parent=1 // pred_check_branch
      %49 = sbr.rel (0) target = $region13
    $region12: #{tpu_custom_call.1} parent=1 // pred_region
      %50 = dma.done [#allocation3], 1024
    $region13: #{tpu_custom_call.1} parent=1 // pred_fallthru
      _
    // Predicated region
    $region14: #{tpu_custom_call.1} parent=1 // pred_check
      _
    $region15: #{tpu_custom_call.1} parent=1 // pred_check_branch
      %52 = sbr.rel (0) target = $region17
    $region16: #{tpu_custom_call.1} parent=1 // pred_region
      %53 = dma.done [#allocation6], 1024
    $region17: #{tpu_custom_call.1} parent=1 // pred_fallthru
      _
    %s54 = sadd.s32 0, 0
    %s55 = smul.u32 8, %s54
    %s56 = sadd.s32 0, 0
    %s57 = smul.u32 8, %s56
    %p58 = scmp.eq.s32.totalorder 0, 0
    // Predicated region
    $region18: #{tpu_custom_call.1} parent=1 // pred_check
      %p59 = pneg %p58
    $region19: #{tpu_custom_call.1} parent=1 // pred_check_branch
      %61 = sbr.rel (%p59) target = $region21
    $region20: #{tpu_custom_call.1} parent=1 // pred_region
      %62 = vst [vmem:[#allocation7] sm:$0xff] 0.0
      %63 = vst [vmem:[#allocation8] sm:$0xff] 0.0
      %64 = vst [vmem:[#allocation10] sm:$0xff] 0.0
      %65 = vst [vmem:[#allocation11] sm:$0xff] 0.0
    $region21: #{tpu_custom_call.1} parent=1 // pred_fallthru
      _
    %v66 = vld [vmem:[#allocation2] sm:$0xff]
    %v67 = vld [vmem:[#allocation5] sm:$0xff]
    %v68 = vmul.f32 %v66, %v67
    %v69 = vmax.f32 %v66, 0.0
    %v70 = vsub.f32 %v69, %v68
    %v71 = vand.u32 2147483647, %v66
    %v72 = vsub.f32 0.0, %v71
    %v73 = vmul.f32 %v72, 1.442695
    %v74 = vpow.pop %v73
    %v75 = vadd.f32 %v74, 1.0
    %v76 = vlog2.pop %v75
    %v77 = vmul.f32 %v76, 0.6931472
    %v78 = vmul.f32 -0.5, %v74
    %v79 = vadd.f32 %v78, 1.0
    %v80 = vmul.f32 %v79, %v74
    %v81 = vand.u32 2147483647, %v74
    %vm82 = vcmp.lt.f32.partialorder %v81, 0.0004427343
    %v83 = vsel %vm82, %v80, %v77
    %v84 = vadd.f32 %v70, %v83
    %v85 = vld [vmem:[#allocation7] sm:$0xff]
    %v86 = vadd.f32 %v85, %v84
    %87 = vst [vmem:[#allocation7] sm:$0xff] %v86
    %v88 = vld [vmem:[#allocation8] sm:$0xff]
    %v89 = vadd.f32 %v88, %v68
    %90 = vst [vmem:[#allocation8] sm:$0xff] %v89
    %v91 = vld [vmem:[#allocation10] sm:$0xff]
    %v92 = vmul.f32 %v66, %v66
    %v93 = vadd.f32 %v91, %v92
    %94 = vst [vmem:[#allocation10] sm:$0xff] %v93
    %v95 = vld [vmem:[#allocation11] sm:$0xff]
    %v96 = vmul.f32 %v67, %v67
    %v97 = vadd.f32 %v95, %v96
    %98 = vst [vmem:[#allocation11] sm:$0xff] %v97
    %s99 = sadd.s32 0, 8
    %s100 = scalar_lea.vmem [#allocation2], %s99
    %v101 = vld [vmem:[%s100] sm:$0xff]
    %s102 = scalar_lea.vmem [#allocation5], %s99
    %v103 = vld [vmem:[%s102] sm:$0xff]
    %v104 = vmul.f32 %v101, %v103
    %v105 = vmax.f32 %v101, 0.0
    %v106 = vsub.f32 %v105, %v104
    %v107 = vand.u32 2147483647, %v101
    %v108 = vsub.f32 0.0, %v107
    %v109 = vmul.f32 %v108, 1.442695
    %v110 = vpow.pop %v109
    %v111 = vadd.f32 %v110, 1.0
    %v112 = vlog2.pop %v111
    %v113 = vmul.f32 %v112, 0.6931472
    %v114 = vmul.f32 -0.5, %v110
    %v115 = vadd.f32 %v114, 1.0
    %v116 = vmul.f32 %v115, %v110
    %v117 = vand.u32 2147483647, %v110
    %vm118 = vcmp.lt.f32.partialorder %v117, 0.0004427343
    %v119 = vsel %vm118, %v116, %v113
    %v120 = vadd.f32 %v106, %v119
    %v121 = vld [vmem:[#allocation7] sm:$0xff]
    %v122 = vadd.f32 %v121, %v120
    %123 = vst [vmem:[#allocation7] sm:$0xff] %v122
    %v124 = vld [vmem:[#allocation8] sm:$0xff]
    %v125 = vadd.f32 %v124, %v104
    %126 = vst [vmem:[#allocation8] sm:$0xff] %v125
    %v127 = vld [vmem:[#allocation10] sm:$0xff]
    %v128 = vmul.f32 %v101, %v101
    %v129 = vadd.f32 %v127, %v128
    %130 = vst [vmem:[#allocation10] sm:$0xff] %v129
    %v131 = vld [vmem:[#allocation11] sm:$0xff]
    %v132 = vmul.f32 %v103, %v103
    %v133 = vadd.f32 %v131, %v132
    %134 = vst [vmem:[#allocation11] sm:$0xff] %v133
    %s135 = sadd.s32 0, 16
    %s136 = scalar_lea.vmem [#allocation2], %s135
    %v137 = vld [vmem:[%s136] sm:$0xff]
    %s138 = scalar_lea.vmem [#allocation5], %s135
    %v139 = vld [vmem:[%s138] sm:$0xff]
    %v140 = vmul.f32 %v137, %v139
    %v141 = vmax.f32 %v137, 0.0
    %v142 = vsub.f32 %v141, %v140
    %v143 = vand.u32 2147483647, %v137
    %v144 = vsub.f32 0.0, %v143
    %v145 = vmul.f32 %v144, 1.442695
    %v146 = vpow.pop %v145
    %v147 = vadd.f32 %v146, 1.0
    %v148 = vlog2.pop %v147
    %v149 = vmul.f32 %v148, 0.6931472
    %v150 = vmul.f32 -0.5, %v146
    %v151 = vadd.f32 %v150, 1.0
    %v152 = vmul.f32 %v151, %v146
    %v153 = vand.u32 2147483647, %v146
    %vm154 = vcmp.lt.f32.partialorder %v153, 0.0004427343
    %v155 = vsel %vm154, %v152, %v149
    %v156 = vadd.f32 %v142, %v155
    %v157 = vld [vmem:[#allocation7] sm:$0xff]
    %v158 = vadd.f32 %v157, %v156
    %159 = vst [vmem:[#allocation7] sm:$0xff] %v158
    %v160 = vld [vmem:[#allocation8] sm:$0xff]
    %v161 = vadd.f32 %v160, %v140
    %162 = vst [vmem:[#allocation8] sm:$0xff] %v161
    %v163 = vld [vmem:[#allocation10] sm:$0xff]
    %v164 = vmul.f32 %v137, %v137
    %v165 = vadd.f32 %v163, %v164
    %166 = vst [vmem:[#allocation10] sm:$0xff] %v165
    %v167 = vld [vmem:[#allocation11] sm:$0xff]
    %v168 = vmul.f32 %v139, %v139
    %v169 = vadd.f32 %v167, %v168
    %170 = vst [vmem:[#allocation11] sm:$0xff] %v169
    %s171 = sadd.s32 0, 24
    %s172 = scalar_lea.vmem [#allocation2], %s171
    %v173 = vld [vmem:[%s172] sm:$0xff]
    %s174 = scalar_lea.vmem [#allocation5], %s171
    %v175 = vld [vmem:[%s174] sm:$0xff]
    %v176 = vmul.f32 %v173, %v175
    %v177 = vmax.f32 %v173, 0.0
    %v178 = vsub.f32 %v177, %v176
    %v179 = vand.u32 2147483647, %v173
    %v180 = vsub.f32 0.0, %v179
    %v181 = vmul.f32 %v180, 1.442695
    %v182 = vpow.pop %v181
    %v183 = vadd.f32 %v182, 1.0
    %v184 = vlog2.pop %v183
    %v185 = vmul.f32 %v184, 0.6931472
    %v186 = vmul.f32 -0.5, %v182
    %v187 = vadd.f32 %v186, 1.0
    %v188 = vmul.f32 %v187, %v182
    %v189 = vand.u32 2147483647, %v182
    %vm190 = vcmp.lt.f32.partialorder %v189, 0.0004427343
    %v191 = vsel %vm190, %v188, %v185
    %v192 = vadd.f32 %v178, %v191
    %v193 = vld [vmem:[#allocation7] sm:$0xff]
    %v194 = vadd.f32 %v193, %v192
    %195 = vst [vmem:[#allocation7] sm:$0xff] %v194
    %v196 = vld [vmem:[#allocation8] sm:$0xff]
    %v197 = vadd.f32 %v196, %v176
    %198 = vst [vmem:[#allocation8] sm:$0xff] %v197
    %v199 = vld [vmem:[#allocation10] sm:$0xff]
    %v200 = vmul.f32 %v173, %v173
    %v201 = vadd.f32 %v199, %v200
    %202 = vst [vmem:[#allocation10] sm:$0xff] %v201
    %v203 = vld [vmem:[#allocation11] sm:$0xff]
    %v204 = vmul.f32 %v175, %v175
    %v205 = vadd.f32 %v203, %v204
    %206 = vst [vmem:[#allocation11] sm:$0xff] %v205
    %s207 = sadd.s32 0, 32
    %s208 = scalar_lea.vmem [#allocation2], %s207
    %v209 = vld [vmem:[%s208] sm:$0xff]
    %s210 = scalar_lea.vmem [#allocation5], %s207
    %v211 = vld [vmem:[%s210] sm:$0xff]
    %v212 = vmul.f32 %v209, %v211
    %v213 = vmax.f32 %v209, 0.0
    %v214 = vsub.f32 %v213, %v212
    %v215 = vand.u32 2147483647, %v209
    %v216 = vsub.f32 0.0, %v215
    %v217 = vmul.f32 %v216, 1.442695
    %v218 = vpow.pop %v217
    %v219 = vadd.f32 %v218, 1.0
    %v220 = vlog2.pop %v219
    %v221 = vmul.f32 %v220, 0.6931472
    %v222 = vmul.f32 -0.5, %v218
    %v223 = vadd.f32 %v222, 1.0
    %v224 = vmul.f32 %v223, %v218
    %v225 = vand.u32 2147483647, %v218
    %vm226 = vcmp.lt.f32.partialorder %v225, 0.0004427343
    %v227 = vsel %vm226, %v224, %v221
    %v228 = vadd.f32 %v214, %v227
    %v229 = vld [vmem:[#allocation7] sm:$0xff]
    %v230 = vadd.f32 %v229, %v228
    %231 = vst [vmem:[#allocation7] sm:$0xff] %v230
    %v232 = vld [vmem:[#allocation8] sm:$0xff]
    %v233 = vadd.f32 %v232, %v212
    %234 = vst [vmem:[#allocation8] sm:$0xff] %v233
    %v235 = vld [vmem:[#allocation10] sm:$0xff]
    %v236 = vmul.f32 %v209, %v209
    %v237 = vadd.f32 %v235, %v236
    %238 = vst [vmem:[#allocation10] sm:$0xff] %v237
    %v239 = vld [vmem:[#allocation11] sm:$0xff]
    %v240 = vmul.f32 %v211, %v211
    %v241 = vadd.f32 %v239, %v240
    %242 = vst [vmem:[#allocation11] sm:$0xff] %v241
    %s243 = sadd.s32 0, 40
    %s244 = scalar_lea.vmem [#allocation2], %s243
    %v245 = vld [vmem:[%s244] sm:$0xff]
    %s246 = scalar_lea.vmem [#allocation5], %s243
    %v247 = vld [vmem:[%s246] sm:$0xff]
    %v248 = vmul.f32 %v245, %v247
    %v249 = vmax.f32 %v245, 0.0
    %v250 = vsub.f32 %v249, %v248
    %v251 = vand.u32 2147483647, %v245
    %v252 = vsub.f32 0.0, %v251
    %v253 = vmul.f32 %v252, 1.442695
    %v254 = vpow.pop %v253
    %v255 = vadd.f32 %v254, 1.0
    %v256 = vlog2.pop %v255
    %v257 = vmul.f32 %v256, 0.6931472
    %v258 = vmul.f32 -0.5, %v254
    %v259 = vadd.f32 %v258, 1.0
    %v260 = vmul.f32 %v259, %v254
    %v261 = vand.u32 2147483647, %v254
    %vm262 = vcmp.lt.f32.partialorder %v261, 0.0004427343
    %v263 = vsel %vm262, %v260, %v257
    %v264 = vadd.f32 %v250, %v263
    %v265 = vld [vmem:[#allocation7] sm:$0xff]
    %v266 = vadd.f32 %v265, %v264
    %267 = vst [vmem:[#allocation7] sm:$0xff] %v266
    %v268 = vld [vmem:[#allocation8] sm:$0xff]
    %v269 = vadd.f32 %v268, %v248
    %270 = vst [vmem:[#allocation8] sm:$0xff] %v269
    %v271 = vld [vmem:[#allocation10] sm:$0xff]
    %v272 = vmul.f32 %v245, %v245
    %v273 = vadd.f32 %v271, %v272
    %274 = vst [vmem:[#allocation10] sm:$0xff] %v273
    %v275 = vld [vmem:[#allocation11] sm:$0xff]
    %v276 = vmul.f32 %v247, %v247
    %v277 = vadd.f32 %v275, %v276
    %278 = vst [vmem:[#allocation11] sm:$0xff] %v277
    %s279 = sadd.s32 0, 48
    %s280 = scalar_lea.vmem [#allocation2], %s279
    %v281 = vld [vmem:[%s280] sm:$0xff]
    %s282 = scalar_lea.vmem [#allocation5], %s279
    %v283 = vld [vmem:[%s282] sm:$0xff]
    %v284 = vmul.f32 %v281, %v283
    %v285 = vmax.f32 %v281, 0.0
    %v286 = vsub.f32 %v285, %v284
    %v287 = vand.u32 2147483647, %v281
    %v288 = vsub.f32 0.0, %v287
    %v289 = vmul.f32 %v288, 1.442695
    %v290 = vpow.pop %v289
    %v291 = vadd.f32 %v290, 1.0
    %v292 = vlog2.pop %v291
    %v293 = vmul.f32 %v292, 0.6931472
    %v294 = vmul.f32 -0.5, %v290
    %v295 = vadd.f32 %v294, 1.0
    %v296 = vmul.f32 %v295, %v290
    %v297 = vand.u32 2147483647, %v290
    %vm298 = vcmp.lt.f32.partialorder %v297, 0.0004427343
    %v299 = vsel %vm298, %v296, %v293
    %v300 = vadd.f32 %v286, %v299
    %v301 = vld [vmem:[#allocation7] sm:$0xff]
    %v302 = vadd.f32 %v301, %v300
    %303 = vst [vmem:[#allocation7] sm:$0xff] %v302
    %v304 = vld [vmem:[#allocation8] sm:$0xff]
    %v305 = vadd.f32 %v304, %v284
    %306 = vst [vmem:[#allocation8] sm:$0xff] %v305
    %v307 = vld [vmem:[#allocation10] sm:$0xff]
    %v308 = vmul.f32 %v281, %v281
    %v309 = vadd.f32 %v307, %v308
    %310 = vst [vmem:[#allocation10] sm:$0xff] %v309
    %v311 = vld [vmem:[#allocation11] sm:$0xff]
    %v312 = vmul.f32 %v283, %v283
    %v313 = vadd.f32 %v311, %v312
    %314 = vst [vmem:[#allocation11] sm:$0xff] %v313
    %s315 = sadd.s32 0, 56
    %s316 = scalar_lea.vmem [#allocation2], %s315
    %v317 = vld [vmem:[%s316] sm:$0xff]
    %s318 = scalar_lea.vmem [#allocation5], %s315
    %v319 = vld [vmem:[%s318] sm:$0xff]
    %v320 = vmul.f32 %v317, %v319
    %v321 = vmax.f32 %v317, 0.0
    %v322 = vsub.f32 %v321, %v320
    %v323 = vand.u32 2147483647, %v317
    %v324 = vsub.f32 0.0, %v323
    %v325 = vmul.f32 %v324, 1.442695
    %v326 = vpow.pop %v325
    %v327 = vadd.f32 %v326, 1.0
    %v328 = vlog2.pop %v327
    %v329 = vmul.f32 %v328, 0.6931472
    %v330 = vmul.f32 -0.5, %v326
    %v331 = vadd.f32 %v330, 1.0
    %v332 = vmul.f32 %v331, %v326
    %v333 = vand.u32 2147483647, %v326
    %vm334 = vcmp.lt.f32.partialorder %v333, 0.0004427343
    %v335 = vsel %vm334, %v332, %v329
    %v336 = vadd.f32 %v322, %v335
    %v337 = vld [vmem:[#allocation7] sm:$0xff]
    %v338 = vadd.f32 %v337, %v336
    %339 = vst [vmem:[#allocation7] sm:$0xff] %v338
    %v340 = vld [vmem:[#allocation8] sm:$0xff]
    %v341 = vadd.f32 %v340, %v320
    %342 = vst [vmem:[#allocation8] sm:$0xff] %v341
    %v343 = vld [vmem:[#allocation10] sm:$0xff]
    %v344 = vmul.f32 %v317, %v317
    %v345 = vadd.f32 %v343, %v344
    %346 = vst [vmem:[#allocation10] sm:$0xff] %v345
    %v347 = vld [vmem:[#allocation11] sm:$0xff]
    %v348 = vmul.f32 %v319, %v319
    %v349 = vadd.f32 %v347, %v348
    %350 = vst [vmem:[#allocation11] sm:$0xff] %v349
    // Predicated region
    $region22: #{tpu_custom_call.1} parent=1 // pred_check
      _
    $region23: #{tpu_custom_call.1} parent=1 // pred_check_branch
      %352 = sbr.rel (0) target = $region25
    $region24: #{tpu_custom_call.1} parent=1 // pred_region
      %s354 = ssub.s32 128, 128
      %355 = vsyncadd [#allocation4], %s354
      %s357 = sshll.u32 [#allocation7], 4
      %s358 = int_to_ptr.vmem [resolvable:$true] %s357
      %360 = dma.vmem_to_hbm [thread:$0]  %s358, 128, %s2, [#allocation4]
    $region25: #{tpu_custom_call.1} parent=1 // pred_fallthru
      _
    // Predicated region
    $region26: #{tpu_custom_call.1} parent=1 // pred_check
      _
    $region27: #{tpu_custom_call.1} parent=1 // pred_check_branch
      %362 = sbr.rel (0) target = $region29
    $region28: #{tpu_custom_call.1} parent=1 // pred_region
      %s364 = ssub.s32 128, 128
      %365 = vsyncadd [#allocation9], %s364
      %s367 = sshll.u32 [#allocation8], 4
      %s368 = int_to_ptr.vmem [resolvable:$true] %s367
      %370 = dma.vmem_to_hbm [thread:$0]  %s368, 128, %s3, [#allocation9]
    $region29: #{tpu_custom_call.1} parent=1 // pred_fallthru
      _
    // Predicated region
    $region30: #{tpu_custom_call.1} parent=1 // pred_check
      _
    $region31: #{tpu_custom_call.1} parent=1 // pred_check_branch
      %372 = sbr.rel (0) target = $region33
    $region32: #{tpu_custom_call.1} parent=1 // pred_region
      %s374 = ssub.s32 128, 128
      %375 = vsyncadd [#allocation9], %s374
      %s377 = sshll.u32 [#allocation10], 4
      %s378 = int_to_ptr.vmem [resolvable:$true] %s377
      %380 = dma.vmem_to_hbm [thread:$0]  %s378, 128, %s4, [#allocation9]
    $region33: #{tpu_custom_call.1} parent=1 // pred_fallthru
      _
    // Predicated region
    $region34: #{tpu_custom_call.1} parent=1 // pred_check
      _
    $region35: #{tpu_custom_call.1} parent=1 // pred_check_branch
      %382 = sbr.rel (0) target = $region37
    $region36: #{tpu_custom_call.1} parent=1 // pred_region
      %s384 = ssub.s32 128, 128
      %385 = vsyncadd [#allocation12], %s384
      %s387 = sshll.u32 [#allocation11], 4
      %s388 = int_to_ptr.vmem [resolvable:$true] %s387
      %390 = dma.vmem_to_hbm [thread:$0]  %s388, 128, %s5, [#allocation12]
    $region37: #{tpu_custom_call.1} parent=1 // pred_fallthru
      _
    // Predicated region
    $region38: #{tpu_custom_call.1} parent=1 // pred_check
      _
    $region39: #{tpu_custom_call.1} parent=1 // pred_check_branch
      %392 = sbr.rel (0) target = $region41
    $region40: #{tpu_custom_call.1} parent=1 // pred_region
      %393 = dma.done [#allocation4], 128
    $region41: #{tpu_custom_call.1} parent=1 // pred_fallthru
      _
    // Predicated region
    $region42: #{tpu_custom_call.1} parent=1 // pred_check
      _
    $region43: #{tpu_custom_call.1} parent=1 // pred_check_branch
      %395 = sbr.rel (0) target = $region45
    $region44: #{tpu_custom_call.1} parent=1 // pred_region
      %396 = dma.done [#allocation9], 128
    $region45: #{tpu_custom_call.1} parent=1 // pred_fallthru
      _
    // Predicated region
    $region46: #{tpu_custom_call.1} parent=1 // pred_check
      _
    $region47: #{tpu_custom_call.1} parent=1 // pred_check_branch
      %398 = sbr.rel (0) target = $region49
    $region48: #{tpu_custom_call.1} parent=1 // pred_region
      %399 = dma.done [#allocation9], 128
    $region49: #{tpu_custom_call.1} parent=1 // pred_fallthru
      _
    // Predicated region
    $region50: #{tpu_custom_call.1} parent=1 // pred_check
      _
    $region51: #{tpu_custom_call.1} parent=1 // pred_check_branch
      %401 = sbr.rel (0) target = $region53
    $region52: #{tpu_custom_call.1} parent=1 // pred_region
      %402 = dma.done [#allocation12], 128
    $region53: #{tpu_custom_call.1} parent=1 // pred_fallthru
      _
    %403 = vsyncpa [#allocation3], 1
    %404 = vsyncpa [#allocation6], 1
    %405 = vsyncpa [#allocation4], 1
    %406 = vsyncpa [#allocation9], 1
    %407 = vsyncpa [#allocation12], 1

</llo_original>
